<compile_context>
chip_gen: v5e
topology: v5e:2x2
jax: 0.10.0
libtpu: 0.0.40
codegen_flags: <defaults>
</compile_context>

<pallas_src>
import jax
import jax.numpy as jnp
import numpy as np
from jax.experimental import pallas as pl
from jax.experimental.pallas import tpu as pltpu

_LEAKY_SLOPE = 0.01  # torch.nn.LeakyReLU default negative_slope


def _leaky_relu(v):
    # slope < 1  =>  max(v, slope*v) == leaky_relu(v)
    return jnp.maximum(v, _LEAKY_SLOPE * v)


def _mlp_kernel(x_ref, w1_ref, b1_ref, w2_ref, b2_ref, o_ref):
    # x: (TB, d_in_p) bf16 ; w1: (d_in_p, H_p) bf16 ; b1: (1, H_p) f32
    h = jnp.dot(x_ref[...], w1_ref[...],
                preferred_element_type=jnp.float32) + b1_ref[...]
    h = _leaky_relu(h)
    y = jnp.dot(h.astype(w2_ref.dtype), w2_ref[...],
                preferred_element_type=jnp.float32) + b2_ref[...]
    o_ref[...] = _leaky_relu(y)


def _round_up(x, m):
    return (x + m - 1) // m * m


def prepare_params(params, *, compute_dtype=jnp.bfloat16):
    """One-time parameter conversion (do NOT call per forward).

    params: w1 (d_in, hidden), w2 (hidden, d_out) -- i.e. torch.nn.Linear
            weights already transposed to (in_features, out_features);
            b1 (hidden,) or (1, hidden); b2 (d_out,) or (1, d_out).
    Pads all feature dims to lane-dense multiples of 128 and casts the weight
    matrices to `compute_dtype` (bf16 MXU path); biases stay f32.
    """
    w1 = jnp.asarray(params["w1"])
    w2 = jnp.asarray(params["w2"])
    b1 = jnp.asarray(params["b1"]).reshape(1, -1)
    b2 = jnp.asarray(params["b2"]).reshape(1, -1)

    d_in, hidden = w1.shape
    d_out = w2.shape[1]
    d_in_p = _round_up(d_in, 128)
    h_p = _round_up(hidden, 128)
    d_out_p = _round_up(d_out, 128)

    return {
        "w1": jnp.pad(w1, ((0, d_in_p - d_in), (0, h_p - hidden))).astype(compute_dtype),
        "b1": jnp.pad(b1, ((0, 0), (0, h_p - hidden))).astype(jnp.float32),
        "w2": jnp.pad(w2, ((0, h_p - hidden), (0, d_out_p - d_out))).astype(compute_dtype),
        "b2": jnp.pad(b2, ((0, 0), (0, d_out_p - d_out))).astype(jnp.float32),
        "d_in": d_in,
        "d_out": d_out,
        "compute_dtype": compute_dtype,
    }


def rsm_predictor_forward(prepared, x, *, batch_tile=None):
    """Pallas-backed RSMPredictor.forward.

    prepared: output of prepare_params().
    x: (..., d_in) float array; flattened to (-1, d_in).
    returns (N, d_out) float32.
    """
    w1, b1, w2, b2 = prepared["w1"], prepared["b1"], prepared["w2"], prepared["b2"]
    d_in, d_out = prepared["d_in"], prepared["d_out"]
    cdt = prepared["compute_dtype"]
    d_in_p, h_p = w1.shape
    d_out_p = w2.shape[1]

    x2 = jnp.asarray(x).reshape(-1, d_in)  # mirrors .view(-1, d_out) on output
    bsz = x2.shape[0]

    if batch_tile is None:
        # Small batch: single grid step (one MXU-filling tile, no per-step
        # pipeline overhead).  Large batch: 256-row tiles (MXU pass height on
        # v6e/v7x) -> multi-step grid that double-buffers x/out and can be
        # split across v7x's two TensorCores via "parallel" semantics.
        batch_tile = _round_up(bsz, 16) if bsz <= 256 else 256
    b_pad = _round_up(bsz, batch_tile)

    # Pad batch + d_in lanes (exact: zero rows are sliced off, zero x columns
    # meet zero W1 rows), then cast activations to the bf16 compute dtype.
    x_p = x2
    if (b_pad, d_in_p) != (bsz, d_in):
        x_p = jnp.pad(x2, ((0, b_pad - bsz), (0, d_in_p - d_in)))
    x_p = x_p.astype(cdt)

    grid = (b_pad // batch_tile,)

    out_p = pl.pallas_call(
        _mlp_kernel,
        out_shape=jax.ShapeDtypeStruct((b_pad, d_out_p), jnp.float32),
        grid=grid,
        in_specs=[
            pl.BlockSpec((batch_tile, d_in_p), lambda i: (i, 0)),  # x: tiled over batch
            pl.BlockSpec((d_in_p, h_p), lambda i: (0, 0)),         # W1: VMEM-resident
            pl.BlockSpec((1, h_p), lambda i: (0, 0)),              # b1: resident
            pl.BlockSpec((h_p, d_out_p), lambda i: (0, 0)),        # W2: resident
            pl.BlockSpec((1, d_out_p), lambda i: (0, 0)),          # b2: resident
        ],
        out_specs=pl.BlockSpec((batch_tile, d_out_p), lambda i: (i, 0)),
        compiler_params=pltpu.CompilerParams(
            dimension_semantics=("parallel",),
        ),
    )(x_p, w1, b1, w2, b2)

    # Slice off batch + lane padding -> equivalent of .view(-1, d_out).
    return out_p[:bsz, :d_out]


def rsm_predictor_reference(params, x):
    """Pure-JAX f32 reference mirroring the PyTorch forward."""
    def lrelu(v):
        return jnp.where(v >= 0, v, _LEAKY_SLOPE * v)

    b1 = jnp.asarray(params["b1"]).reshape(1, -1)
    b2 = jnp.asarray(params["b2"]).reshape(1, -1)
    h = lrelu(x @ params["w1"] + b1)
    y = lrelu(h @ params["w2"] + b2)
    return y.reshape(-1, params["w2"].shape[1])


if __name__ == "__main__":
    # Default RSMPredictor sizes: d_in = 28*28, hidden_size = 20, d_out = 10.
    B, D_IN, HIDDEN, D_OUT = 16, 28 * 28, 20, 10

    key = jax.random.PRNGKey(0)
    ks = jax.random.split(key, 5)

    params = {
        "w1": jax.random.normal(ks[0], (D_IN, HIDDEN), jnp.float32) * 0.05,
        "b1": jax.random.normal(ks[1], (HIDDEN,), jnp.float32) * 0.01,
        "w2": jax.random.normal(ks[2], (HIDDEN, D_OUT), jnp.float32) * 0.05,
        "b2": jax.random.normal(ks[3], (D_OUT,), jnp.float32) * 0.01,
    }
    x = jax.random.normal(ks[4], (B, D_IN), jnp.float32)

    prepared = prepare_params(params)            # one-time pad + bf16 cast
    out = rsm_predictor_forward(prepared, x)     # grid=(1,): single 16x896 tile
    out = jax.block_until_ready(out)

    ref = rsm_predictor_reference(params, x)
    assert out.shape == (B, D_OUT)
    # bf16 inputs with f32 accumulation -> small numeric delta vs f32 reference.
    assert np.allclose(np.asarray(out), np.asarray(ref), atol=3e-2, rtol=3e-2), (
        float(np.abs(np.asarray(out) - np.asarray(ref)).max()))

    print("KERNEL_OK")
</pallas_src>

<mosaic_0001>
module attributes {stable_mosaic.version = 11 : i64} {
  func.func @_mlp_kernel(%arg0: i32, %arg1: memref<16x896xbf16, #tpu.memory_space<vmem>>, %arg2: memref<896x128xbf16, #tpu.memory_space<vmem>>, %arg3: memref<1x128xf32, #tpu.memory_space<vmem>>, %arg4: memref<128x128xbf16, #tpu.memory_space<vmem>>, %arg5: memref<1x128xf32, #tpu.memory_space<vmem>>, %arg6: memref<16x128xf32, #tpu.memory_space<vmem>>) attributes {dimension_semantics = [#tpu.dimension_semantics<parallel>], iteration_bounds = array<i64: 1>, scalar_prefetch = 0 : i64, scratch_operands = 0 : i64, tpu.core_type = #tpu.core_type<tc>, window_params = [{transform_indices = @transform_0, window_bounds = array<i64: 16, 896>}, {pipeline_mode = #tpu.pipeline_mode<synchronous>, transform_indices = @transform_1, window_bounds = array<i64: 896, 128>}, {pipeline_mode = #tpu.pipeline_mode<synchronous>, transform_indices = @transform_2, window_bounds = array<i64: 1, 128>}, {pipeline_mode = #tpu.pipeline_mode<synchronous>, transform_indices = @transform_3, window_bounds = array<i64: 128, 128>}, {pipeline_mode = #tpu.pipeline_mode<synchronous>, transform_indices = @transform_4, window_bounds = array<i64: 1, 128>}, {transform_indices = @transform_5, window_bounds = array<i64: 16, 128>}]} {
    %c0 = arith.constant 0 : index
    %c0_0 = arith.constant 0 : index
    %0 = vector.load %arg1[%c0, %c0_0] : memref<16x896xbf16, #tpu.memory_space<vmem>>, vector<16x896xbf16>
    %c0_1 = arith.constant 0 : index
    %c0_2 = arith.constant 0 : index
    %1 = vector.load %arg2[%c0_1, %c0_2] : memref<896x128xbf16, #tpu.memory_space<vmem>>, vector<896x128xbf16>
    %cst = arith.constant dense<0.000000e+00> : vector<16x128xf32>
    %2 = tpu.matmul %0, %1, %cst {dimension_numbers = #tpu.dot_dimension_numbers<[1], [0], [0], [1], [0, 0, 1, 1], [], []>} : vector<16x896xbf16>, vector<896x128xbf16>, vector<16x128xf32> -> vector<16x128xf32>
    %c0_3 = arith.constant 0 : index
    %c0_4 = arith.constant 0 : index
    %3 = vector.load %arg3[%c0_3, %c0_4] : memref<1x128xf32, #tpu.memory_space<vmem>>, vector<1x128xf32>
    %4 = vector.broadcast %3 : vector<1x128xf32> to vector<16x128xf32>
    %5 = arith.addf %2, %4 : vector<16x128xf32>
    %cst_5 = arith.constant 0.00999999977 : f32
    %6 = vector.broadcast %cst_5 : f32 to vector<16x128xf32>
    %7 = arith.mulf %6, %5 : vector<16x128xf32>
    %8 = arith.maximumf %5, %7 : vector<16x128xf32>
    %9 = arith.truncf %8 : vector<16x128xf32> to vector<16x128xbf16>
    %c0_6 = arith.constant 0 : index
    %c0_7 = arith.constant 0 : index
    %10 = vector.load %arg4[%c0_6, %c0_7] : memref<128x128xbf16, #tpu.memory_space<vmem>>, vector<128x128xbf16>
    %cst_8 = arith.constant dense<0.000000e+00> : vector<16x128xf32>
    %11 = tpu.matmul %9, %10, %cst_8 {dimension_numbers = #tpu.dot_dimension_numbers<[1], [0], [0], [1], [0, 0, 1, 1], [], []>} : vector<16x128xbf16>, vector<128x128xbf16>, vector<16x128xf32> -> vector<16x128xf32>
    %c0_9 = arith.constant 0 : index
    %c0_10 = arith.constant 0 : index
    %12 = vector.load %arg5[%c0_9, %c0_10] : memref<1x128xf32, #tpu.memory_space<vmem>>, vector<1x128xf32>
    %13 = vector.broadcast %12 : vector<1x128xf32> to vector<16x128xf32>
    %14 = arith.addf %11, %13 : vector<16x128xf32>
    %cst_11 = arith.constant 0.00999999977 : f32
    %15 = vector.broadcast %cst_11 : f32 to vector<16x128xf32>
    %16 = arith.mulf %15, %14 : vector<16x128xf32>
    %17 = arith.maximumf %14, %16 : vector<16x128xf32>
    %c0_12 = arith.constant 0 : index
    %c0_13 = arith.constant 0 : index
    %18 = vector.load %arg6[%c0_12, %c0_13] : memref<16x128xf32, #tpu.memory_space<vmem>>, vector<16x128xf32>
    tpu.vector_store %arg6[%c0_12, %c0_13], %17 {strides = array<i32>} : memref<16x128xf32, #tpu.memory_space<vmem>>, vector<16x128xf32>,
    return
  }
  func.func @transform_0(%arg0: i32) -> (i32, i32) {
    %c0_i32 = arith.constant 0 : i32
    %c0_i32_0 = arith.constant 0 : i32
    return %arg0, %c0_i32 : i32, i32
  }
  func.func @transform_1(%arg0: i32) -> (i32, i32) {
    %c0_i32 = arith.constant 0 : i32
    %c0_i32_0 = arith.constant 0 : i32
    %c0_i32_1 = arith.constant 0 : i32
    return %c0_i32, %c0_i32_0 : i32, i32
  }
  func.func @transform_2(%arg0: i32) -> (i32, i32) {
    %c0_i32 = arith.constant 0 : i32
    %c0_i32_0 = arith.constant 0 : i32
    %c0_i32_1 = arith.constant 0 : i32
    return %c0_i32, %c0_i32_0 : i32, i32
  }
  func.func @transform_3(%arg0: i32) -> (i32, i32) {
    %c0_i32 = arith.constant 0 : i32
    %c0_i32_0 = arith.constant 0 : i32
    %c0_i32_1 = arith.constant 0 : i32
    return %c0_i32, %c0_i32_0 : i32, i32
  }
  func.func @transform_4(%arg0: i32) -> (i32, i32) {
    %c0_i32 = arith.constant 0 : i32
    %c0_i32_0 = arith.constant 0 : i32
    %c0_i32_1 = arith.constant 0 : i32
    return %c0_i32, %c0_i32_0 : i32, i32
  }
  func.func @transform_5(%arg0: i32) -> (i32, i32) {
    %c0_i32 = arith.constant 0 : i32
    %c0_i32_0 = arith.constant 0 : i32
    return %arg0, %c0_i32 : i32, i32
  }
}

</mosaic_0001>

<llo_original>
// kernel: tpu_custom_call.1
$region0: #{tpu_custom_call.1}
  #allocation0 [shape = 'u32[]', space=smem, size = 0x4, offset = 0x4, fixed_abs, tag = 'smem constant byte address 0x4 - core index']
  #allocation1 [shape = 'u32[72,128]{1,0:T(1,128)}', space=vmem, size = 0x9000, scoped, tag = 'internal scratch']
  %s0 = inlined_call_operand.hbm [shape: bf16[16,896], index: 0, kind: input, shape index: {}]
  %s1 = inlined_call_operand.hbm [shape: bf16[896,128], index: 1, kind: input, shape index: {}]
  %s2 = inlined_call_operand.vmem [shape: f32[1,128], index: 2, kind: input, shape index: {}]
  %s3 = inlined_call_operand.hbm [shape: bf16[128,128], index: 3, kind: input, shape index: {}]
  %s4 = inlined_call_operand.vmem [shape: f32[1,128], index: 4, kind: input, shape index: {}]
  %s5 = inlined_call_operand.hbm [shape: f32[16,128], index: 5, kind: output, shape index: {}]
  %s6 = sld [smem:[#allocation0]]
  $region42: #{tpu_custom_call.1} parent=0
    _
  %s8 = ssub.s32 1, %s6
  %s9 = scalar_select 0, %s8, %s6
  $region1: #{tpu_custom_call.1} parent=0
    #allocation2 [shape = 'u8[28672]{0}', space=vmem, size = 0x7000, scoped, tag = 'input window, operand 0, single buffered']
    #allocation3 [shape = 's32[1]{0}', space=sflag, size = 0x4, scoped, tag = 'scoped memory for tpu_custom_call.1']
    #allocation4 [shape = 's32[1]{0}', space=sflag, size = 0x4, scoped, tag = 'scoped memory for tpu_custom_call.1']
    #allocation5 [shape = 'u8[229376]{0}', space=vmem, size = 0x38000, scoped, tag = 'input window, operand 1, single buffered']
    #allocation6 [shape = 's32[1]{0}', space=sflag, size = 0x4, scoped, tag = 'scoped memory for tpu_custom_call.1']
    #allocation7 [shape = 'u8[32768]{0}', space=vmem, size = 0x8000, scoped, tag = 'input window, operand 3, single buffered']
    #allocation8 [shape = 'u8[8192]{0}', space=vmem, size = 0x2000, scoped, tag = 'output window, operand 0, single buffered']
    %10 = vsyncpa [#allocation3], 0
    %11 = vsyncpa [#allocation6], 0
    %12 = vsyncpa [#allocation4], 0
    // Predicated region
    $region2: #{tpu_custom_call.1} parent=1 // pred_check
      _
    $region3: #{tpu_custom_call.1} parent=1 // pred_check_branch
      %14 = sbr.rel (0) target = $region5
    $region4: #{tpu_custom_call.1} parent=1 // pred_region
      %16 = vsyncadd [#allocation3], 0
      %s17 = sshll.u32 %s0, 4
      %s18 = int_to_ptr.hbm [resolvable:$true] %s17
      %s19 = sshll.u32 [#allocation2], 4
      %s20 = int_to_ptr.vmem [resolvable:$true] %s19
      %25 = dma.hbm_to_vmem [thread:$0]  %s18, 896, %s20, [#allocation3], 448, 448, 28
    $region5: #{tpu_custom_call.1} parent=1 // pred_fallthru
      _
    // Predicated region
    $region6: #{tpu_custom_call.1} parent=1 // pred_check
      _
    $region7: #{tpu_custom_call.1} parent=1 // pred_check_branch
      %27 = sbr.rel (0) target = $region9
    $region8: #{tpu_custom_call.1} parent=1 // pred_region
      %29 = vsyncadd [#allocation6], 0
      %s30 = sshll.u32 %s1, 4
      %s31 = int_to_ptr.hbm [resolvable:$true] %s30
      %s32 = sshll.u32 [#allocation5], 4
      %s33 = int_to_ptr.vmem [resolvable:$true] %s32
      %38 = dma.hbm_to_vmem [thread:$0]  %s31, 7168, %s33, [#allocation6], 64, 64, 4
    $region9: #{tpu_custom_call.1} parent=1 // pred_fallthru
      _
    // Predicated region
    $region10: #{tpu_custom_call.1} parent=1 // pred_check
      _
    $region11: #{tpu_custom_call.1} parent=1 // pred_check_branch
      %40 = sbr.rel (0) target = $region13
    $region12: #{tpu_custom_call.1} parent=1 // pred_region
      _
    $region13: #{tpu_custom_call.1} parent=1 // pred_fallthru
      _
    // Predicated region
    $region14: #{tpu_custom_call.1} parent=1 // pred_check
      _
    $region15: #{tpu_custom_call.1} parent=1 // pred_check_branch
      %42 = sbr.rel (0) target = $region17
    $region16: #{tpu_custom_call.1} parent=1 // pred_region
      %44 = vsyncadd [#allocation6], 0
      %s45 = sshll.u32 %s3, 4
      %s46 = int_to_ptr.hbm [resolvable:$true] %s45
      %s47 = sshll.u32 [#allocation7], 4
      %s48 = int_to_ptr.vmem [resolvable:$true] %s47
      %53 = dma.hbm_to_vmem [thread:$0]  %s46, 1024, %s48, [#allocation6], 64, 64, 4
    $region17: #{tpu_custom_call.1} parent=1 // pred_fallthru
      _
    // Predicated region
    $region18: #{tpu_custom_call.1} parent=1 // pred_check
      _
    $region19: #{tpu_custom_call.1} parent=1 // pred_check_branch
      %55 = sbr.rel (0) target = $region21
    $region20: #{tpu_custom_call.1} parent=1 // pred_region
      _
    $region21: #{tpu_custom_call.1} parent=1 // pred_fallthru
      _
    // Predicated region
    $region22: #{tpu_custom_call.1} parent=1 // pred_check
      _
    $region23: #{tpu_custom_call.1} parent=1 // pred_check_branch
      %57 = sbr.rel (0) target = $region25
    $region24: #{tpu_custom_call.1} parent=1 // pred_region
      %59 = dma.done [#allocation3], 896
    $region25: #{tpu_custom_call.1} parent=1 // pred_fallthru
      _
    // Predicated region
    $region26: #{tpu_custom_call.1} parent=1 // pred_check
      _
    $region27: #{tpu_custom_call.1} parent=1 // pred_check_branch
      %61 = sbr.rel (0) target = $region29
    $region28: #{tpu_custom_call.1} parent=1 // pred_region
      %63 = dma.done [#allocation6], 7168
    $region29: #{tpu_custom_call.1} parent=1 // pred_fallthru
      _
    // Predicated region
    $region30: #{tpu_custom_call.1} parent=1 // pred_check
      _
    $region31: #{tpu_custom_call.1} parent=1 // pred_check_branch
      %65 = sbr.rel (0) target = $region33
    $region32: #{tpu_custom_call.1} parent=1 // pred_region
      %67 = dma.done [#allocation6], 1024
    $region33: #{tpu_custom_call.1} parent=1 // pred_fallthru
      _
    %v68 = vld [vmem:[#allocation2] sm:$0xff]
    %v69 = vld [vmem:[#allocation2 + $0x8] sm:$0xff]
    %v70 = vld [vmem:[#allocation2 + $0x10] sm:$0xff]
    %v71 = vld [vmem:[#allocation2 + $0x18] sm:$0xf]
    %v72 = vld [vmem:[#allocation2 + $0x1c] sm:$0xff]
    %v73 = vld [vmem:[#allocation2 + $0x24] sm:$0xff]
    %v74 = vld [vmem:[#allocation2 + $0x2c] sm:$0xff]
    %v75 = vld [vmem:[#allocation2 + $0x34] sm:$0xf]
    %v76 = vld [vmem:[#allocation5] sm:$0xf]
    %v77 = vld [vmem:[#allocation5 + $0x4] sm:$0xf]
    %v78 = vld [vmem:[#allocation5 + $0x8] sm:$0xf]
    %v79 = vld [vmem:[#allocation5 + $0xc] sm:$0xf]
    %v80 = vld [vmem:[#allocation5 + $0x10] sm:$0xf]
    %v81 = vld [vmem:[#allocation5 + $0x14] sm:$0xf]
    %v82 = vld [vmem:[#allocation5 + $0x18] sm:$0xf]
    %v83 = vld [vmem:[#allocation5 + $0x1c] sm:$0xf]
    %v84 = vld [vmem:[#allocation5 + $0x20] sm:$0xf]
    %v85 = vld [vmem:[#allocation5 + $0x24] sm:$0xf]
    %v86 = vld [vmem:[#allocation5 + $0x28] sm:$0xf]
    %v87 = vld [vmem:[#allocation5 + $0x2c] sm:$0xf]
    %v88 = vld [vmem:[#allocation5 + $0x30] sm:$0xf]
    %v89 = vld [vmem:[#allocation5 + $0x34] sm:$0xf]
    %v90 = vld [vmem:[#allocation5 + $0x38] sm:$0xf]
    %v91 = vld [vmem:[#allocation5 + $0x3c] sm:$0xf]
    %v92 = vld [vmem:[#allocation5 + $0x40] sm:$0xf]
    %v93 = vld [vmem:[#allocation5 + $0x44] sm:$0xf]
    %v94 = vld [vmem:[#allocation5 + $0x48] sm:$0xf]
    %v95 = vld [vmem:[#allocation5 + $0x4c] sm:$0xf]
    %v96 = vld [vmem:[#allocation5 + $0x50] sm:$0xf]
    %v97 = vld [vmem:[#allocation5 + $0x54] sm:$0xf]
    %v98 = vld [vmem:[#allocation5 + $0x58] sm:$0xf]
    %v99 = vld [vmem:[#allocation5 + $0x5c] sm:$0xf]
    %v100 = vld [vmem:[#allocation5 + $0x60] sm:$0xf]
    %v101 = vld [vmem:[#allocation5 + $0x64] sm:$0xf]
    %v102 = vld [vmem:[#allocation5 + $0x68] sm:$0xf]
    %v103 = vld [vmem:[#allocation5 + $0x6c] sm:$0xf]
    %v104 = vld [vmem:[#allocation5 + $0x70] sm:$0xf]
    %v105 = vld [vmem:[#allocation5 + $0x74] sm:$0xf]
    %v106 = vld [vmem:[#allocation5 + $0x78] sm:$0xf]
    %v107 = vld [vmem:[#allocation5 + $0x7c] sm:$0xf]
    %v108 = vld [vmem:[#allocation5 + $0x80] sm:$0xf]
    %v109 = vld [vmem:[#allocation5 + $0x84] sm:$0xf]
    %v110 = vld [vmem:[#allocation5 + $0x88] sm:$0xf]
    %v111 = vld [vmem:[#allocation5 + $0x8c] sm:$0xf]
    %v112 = vld [vmem:[#allocation5 + $0x90] sm:$0xf]
    %v113 = vld [vmem:[#allocation5 + $0x94] sm:$0xf]
    %v114 = vld [vmem:[#allocation5 + $0x98] sm:$0xf]
    %v115 = vld [vmem:[#allocation5 + $0x9c] sm:$0xf]
    %v116 = vld [vmem:[#allocation5 + $0xa0] sm:$0xf]
    %v117 = vld [vmem:[#allocation5 + $0xa4] sm:$0xf]
    %v118 = vld [vmem:[#allocation5 + $0xa8] sm:$0xf]
    %v119 = vld [vmem:[#allocation5 + $0xac] sm:$0xf]
    %v120 = vld [vmem:[#allocation5 + $0xb0] sm:$0xf]
    %v121 = vld [vmem:[#allocation5 + $0xb4] sm:$0xf]
    %v122 = vld [vmem:[#allocation5 + $0xb8] sm:$0xf]
    %v123 = vld [vmem:[#allocation5 + $0xbc] sm:$0xf]
    %v124 = vld [vmem:[#allocation5 + $0xc0] sm:$0xf]
    %v125 = vld [vmem:[#allocation5 + $0xc4] sm:$0xf]
    %v126 = vld [vmem:[#allocation5 + $0xc8] sm:$0xf]
    %v127 = vld [vmem:[#allocation5 + $0xcc] sm:$0xf]
    %v128 = vld [vmem:[#allocation5 + $0xd0] sm:$0xf]
    %v129 = vld [vmem:[#allocation5 + $0xd4] sm:$0xf]
    %v130 = vld [vmem:[#allocation5 + $0xd8] sm:$0xf]
    %v131 = vld [vmem:[#allocation5 + $0xdc] sm:$0xf]
    %v132 = vld [vmem:[#allocation5 + $0xe0] sm:$0xf]
    %v133 = vld [vmem:[#allocation5 + $0xe4] sm:$0xf]
    %v134 = vld [vmem:[#allocation5 + $0xe8] sm:$0xf]
    %v135 = vld [vmem:[#allocation5 + $0xec] sm:$0xf]
    %v136 = vld [vmem:[#allocation5 + $0xf0] sm:$0xf]
    %v137 = vld [vmem:[#allocation5 + $0xf4] sm:$0xf]
    %v138 = vld [vmem:[#allocation5 + $0xf8] sm:$0xf]
    %v139 = vld [vmem:[#allocation5 + $0xfc] sm:$0xf]
    %v140 = vld [vmem:[#allocation5 + $0x100] sm:$0xf]
    %v141 = vld [vmem:[#allocation5 + $0x104] sm:$0xf]
    %v142 = vld [vmem:[#allocation5 + $0x108] sm:$0xf]
    %v143 = vld [vmem:[#allocation5 + $0x10c] sm:$0xf]
    %v144 = vld [vmem:[#allocation5 + $0x110] sm:$0xf]
    %v145 = vld [vmem:[#allocation5 + $0x114] sm:$0xf]
    %v146 = vld [vmem:[#allocation5 + $0x118] sm:$0xf]
    %v147 = vld [vmem:[#allocation5 + $0x11c] sm:$0xf]
    %v148 = vld [vmem:[#allocation5 + $0x120] sm:$0xf]
    %v149 = vld [vmem:[#allocation5 + $0x124] sm:$0xf]
    %v150 = vld [vmem:[#allocation5 + $0x128] sm:$0xf]
    %v151 = vld [vmem:[#allocation5 + $0x12c] sm:$0xf]
    %v152 = vld [vmem:[#allocation5 + $0x130] sm:$0xf]
    %v153 = vld [vmem:[#allocation5 + $0x134] sm:$0xf]
    %v154 = vld [vmem:[#allocation5 + $0x138] sm:$0xf]
    %v155 = vld [vmem:[#allocation5 + $0x13c] sm:$0xf]
    %v156 = vld [vmem:[#allocation5 + $0x140] sm:$0xf]
    %v157 = vld [vmem:[#allocation5 + $0x144] sm:$0xf]
    %v158 = vld [vmem:[#allocation5 + $0x148] sm:$0xf]
    %v159 = vld [vmem:[#allocation5 + $0x14c] sm:$0xf]
    %v160 = vld [vmem:[#allocation5 + $0x150] sm:$0xf]
    %v161 = vld [vmem:[#allocation5 + $0x154] sm:$0xf]
    %v162 = vld [vmem:[#allocation5 + $0x158] sm:$0xf]
    %v163 = vld [vmem:[#allocation5 + $0x15c] sm:$0xf]
    %v164 = vld [vmem:[#allocation5 + $0x160] sm:$0xf]
    %v165 = vld [vmem:[#allocation5 + $0x164] sm:$0xf]
    %v166 = vld [vmem:[#allocation5 + $0x168] sm:$0xf]
    %v167 = vld [vmem:[#allocation5 + $0x16c] sm:$0xf]
    %v168 = vld [vmem:[#allocation5 + $0x170] sm:$0xf]
    %v169 = vld [vmem:[#allocation5 + $0x174] sm:$0xf]
    %v170 = vld [vmem:[#allocation5 + $0x178] sm:$0xf]
    %v171 = vld [vmem:[#allocation5 + $0x17c] sm:$0xf]
    %v172 = vld [vmem:[#allocation5 + $0x180] sm:$0xf]
    %v173 = vld [vmem:[#allocation5 + $0x184] sm:$0xf]
    %v174 = vld [vmem:[#allocation5 + $0x188] sm:$0xf]
    %v175 = vld [vmem:[#allocation5 + $0x18c] sm:$0xf]
    %v176 = vld [vmem:[#allocation5 + $0x190] sm:$0xf]
    %v177 = vld [vmem:[#allocation5 + $0x194] sm:$0xf]
    %v178 = vld [vmem:[#allocation5 + $0x198] sm:$0xf]
    %v179 = vld [vmem:[#allocation5 + $0x19c] sm:$0xf]
    %v180 = vld [vmem:[#allocation5 + $0x1a0] sm:$0xf]
    %v181 = vld [vmem:[#allocation5 + $0x1a4] sm:$0xf]
    %v182 = vld [vmem:[#allocation5 + $0x1a8] sm:$0xf]
    %v183 = vld [vmem:[#allocation5 + $0x1ac] sm:$0xf]
    %v184 = vld [vmem:[#allocation5 + $0x1b0] sm:$0xf]
    %v185 = vld [vmem:[#allocation5 + $0x1b4] sm:$0xf]
    %v186 = vld [vmem:[#allocation5 + $0x1b8] sm:$0xf]
    %v187 = vld [vmem:[#allocation5 + $0x1bc] sm:$0xf]
    %v188 = vld [vmem:[%s2] sm:$0x1]
    %v190 = vperm.slane %v188, 0
    %v200 = vunpack.c.l.b16 %v68
    %v201 = vunpack.c.h.b16 %v68
    %v202 = vunpack.c.l.b16 %v69
    %v203 = vunpack.c.h.b16 %v69
    %v204 = vunpack.c.l.b16 %v70
    %v205 = vunpack.c.h.b16 %v70
    %v206 = vunpack.c.l.b16 %v71
    %v207 = vunpack.c.l.b16 %v72
    %v208 = vunpack.c.h.b16 %v72
    %v209 = vunpack.c.l.b16 %v73
    %v210 = vunpack.c.h.b16 %v73
    %v211 = vunpack.c.l.b16 %v74
    %v212 = vunpack.c.h.b16 %v74
    %v213 = vunpack.c.l.b16 %v75
    %v214 = vpack.c.b16 %v207, %v200
    %v215 = vpack.c.b16 %v208, %v201
    %v216 = vpack.c.b16 %v209, %v202
    %v217 = vpack.c.b16 %v210, %v203
    %v218 = vpack.c.b16 %v211, %v204
    %v219 = vpack.c.b16 %v212, %v205
    %v220 = vpack.c.b16 %v213, %v206
    %v340 = vunpack.c.l.b16 %v76
    %v341 = vunpack.c.l.b16 %v77
    %v342 = vunpack.c.l.b16 %v78
    %v343 = vunpack.c.l.b16 %v79
    %v344 = vunpack.c.l.b16 %v80
    %v345 = vunpack.c.l.b16 %v81
    %v346 = vunpack.c.l.b16 %v82
    %v347 = vunpack.c.l.b16 %v83
    %v348 = vunpack.c.l.b16 %v84
    %v349 = vunpack.c.l.b16 %v85
    %v350 = vunpack.c.l.b16 %v86
    %v351 = vunpack.c.l.b16 %v87
    %v352 = vunpack.c.l.b16 %v88
    %v353 = vunpack.c.l.b16 %v89
    %v354 = vunpack.c.l.b16 %v90
    %v355 = vunpack.c.l.b16 %v91
    %v356 = vunpack.c.l.b16 %v92
    %v357 = vunpack.c.l.b16 %v93
    %v358 = vunpack.c.l.b16 %v94
    %v359 = vunpack.c.l.b16 %v95
    %v360 = vunpack.c.l.b16 %v96
    %v361 = vunpack.c.l.b16 %v97
    %v362 = vunpack.c.l.b16 %v98
    %v363 = vunpack.c.l.b16 %v99
    %v364 = vunpack.c.l.b16 %v100
    %v365 = vunpack.c.l.b16 %v101
    %v366 = vunpack.c.l.b16 %v102
    %v367 = vunpack.c.l.b16 %v103
    %v368 = vunpack.c.l.b16 %v104
    %v369 = vunpack.c.l.b16 %v105
    %v370 = vunpack.c.l.b16 %v106
    %v371 = vunpack.c.l.b16 %v107
    %v372 = vunpack.c.l.b16 %v108
    %v373 = vunpack.c.l.b16 %v109
    %v374 = vunpack.c.l.b16 %v110
    %v375 = vunpack.c.l.b16 %v111
    %v376 = vunpack.c.l.b16 %v112
    %v377 = vunpack.c.l.b16 %v113
    %v378 = vunpack.c.l.b16 %v114
    %v379 = vunpack.c.l.b16 %v115
    %v380 = vunpack.c.l.b16 %v116
    %v381 = vunpack.c.l.b16 %v117
    %v382 = vunpack.c.l.b16 %v118
    %v383 = vunpack.c.l.b16 %v119
    %v384 = vunpack.c.l.b16 %v120
    %v385 = vunpack.c.l.b16 %v121
    %v386 = vunpack.c.l.b16 %v122
    %v387 = vunpack.c.l.b16 %v123
    %v388 = vunpack.c.l.b16 %v124
    %v389 = vunpack.c.l.b16 %v125
    %v390 = vunpack.c.l.b16 %v126
    %v391 = vunpack.c.l.b16 %v127
    %v392 = vunpack.c.l.b16 %v128
    %v393 = vunpack.c.l.b16 %v129
    %v394 = vunpack.c.l.b16 %v130
    %v395 = vunpack.c.l.b16 %v131
    %v396 = vunpack.c.l.b16 %v132
    %v397 = vunpack.c.l.b16 %v133
    %v398 = vunpack.c.l.b16 %v134
    %v399 = vunpack.c.l.b16 %v135
    %v400 = vunpack.c.l.b16 %v136
    %v401 = vunpack.c.l.b16 %v137
    %v402 = vunpack.c.l.b16 %v138
    %v403 = vunpack.c.l.b16 %v139
    %v404 = vunpack.c.l.b16 %v140
    %v405 = vunpack.c.l.b16 %v141
    %v406 = vunpack.c.l.b16 %v142
    %v407 = vunpack.c.l.b16 %v143
    %v408 = vunpack.c.l.b16 %v144
    %v409 = vunpack.c.l.b16 %v145
    %v410 = vunpack.c.l.b16 %v146
    %v411 = vunpack.c.l.b16 %v147
    %v412 = vunpack.c.l.b16 %v148
    %v413 = vunpack.c.l.b16 %v149
    %v414 = vunpack.c.l.b16 %v150
    %v415 = vunpack.c.l.b16 %v151
    %v416 = vunpack.c.l.b16 %v152
    %v417 = vunpack.c.l.b16 %v153
    %v418 = vunpack.c.l.b16 %v154
    %v419 = vunpack.c.l.b16 %v155
    %v420 = vunpack.c.l.b16 %v156
    %v421 = vunpack.c.l.b16 %v157
    %v422 = vunpack.c.l.b16 %v158
    %v423 = vunpack.c.l.b16 %v159
    %v424 = vunpack.c.l.b16 %v160
    %v425 = vunpack.c.l.b16 %v161
    %v426 = vunpack.c.l.b16 %v162
    %v427 = vunpack.c.l.b16 %v163
    %v428 = vunpack.c.l.b16 %v164
    %v429 = vunpack.c.l.b16 %v165
    %v430 = vunpack.c.l.b16 %v166
    %v431 = vunpack.c.l.b16 %v167
    %v432 = vunpack.c.l.b16 %v168
    %v433 = vunpack.c.l.b16 %v169
    %v434 = vunpack.c.l.b16 %v170
    %v435 = vunpack.c.l.b16 %v171
    %v436 = vunpack.c.l.b16 %v172
    %v437 = vunpack.c.l.b16 %v173
    %v438 = vunpack.c.l.b16 %v174
    %v439 = vunpack.c.l.b16 %v175
    %v440 = vunpack.c.l.b16 %v176
    %v441 = vunpack.c.l.b16 %v177
    %v442 = vunpack.c.l.b16 %v178
    %v443 = vunpack.c.l.b16 %v179
    %v444 = vunpack.c.l.b16 %v180
    %v445 = vunpack.c.l.b16 %v181
    %v446 = vunpack.c.l.b16 %v182
    %v447 = vunpack.c.l.b16 %v183
    %v448 = vunpack.c.l.b16 %v184
    %v449 = vunpack.c.l.b16 %v185
    %v450 = vunpack.c.l.b16 %v186
    %v451 = vunpack.c.l.b16 %v187
    %v452 = vpack.c.b16 %v341, %v340
    %v453 = vpack.c.b16 %v343, %v342
    %v454 = vpack.c.b16 %v345, %v344
    %v455 = vpack.c.b16 %v347, %v346
    %v456 = vpack.c.b16 %v349, %v348
    %v457 = vpack.c.b16 %v351, %v350
    %v458 = vpack.c.b16 %v353, %v352
    %v459 = vpack.c.b16 %v355, %v354
    %v460 = vpack.c.b16 %v357, %v356
    %v461 = vpack.c.b16 %v359, %v358
    %v462 = vpack.c.b16 %v361, %v360
    %v463 = vpack.c.b16 %v363, %v362
    %v464 = vpack.c.b16 %v365, %v364
    %v465 = vpack.c.b16 %v367, %v366
    %v466 = vpack.c.b16 %v369, %v368
    %v467 = vpack.c.b16 %v371, %v370
    %v468 = vpack.c.b16 %v373, %v372
    %v469 = vpack.c.b16 %v375, %v374
    %v470 = vpack.c.b16 %v377, %v376
    %v471 = vpack.c.b16 %v379, %v378
    %v472 = vpack.c.b16 %v381, %v380
    %v473 = vpack.c.b16 %v383, %v382
    %v474 = vpack.c.b16 %v385, %v384
    %v475 = vpack.c.b16 %v387, %v386
    %v476 = vpack.c.b16 %v389, %v388
    %v477 = vpack.c.b16 %v391, %v390
    %v478 = vpack.c.b16 %v393, %v392
    %v479 = vpack.c.b16 %v395, %v394
    %v480 = vpack.c.b16 %v397, %v396
    %v481 = vpack.c.b16 %v399, %v398
    %v482 = vpack.c.b16 %v401, %v400
    %v483 = vpack.c.b16 %v403, %v402
    %v484 = vpack.c.b16 %v405, %v404
    %v485 = vpack.c.b16 %v407, %v406
    %v486 = vpack.c.b16 %v409, %v408
    %v487 = vpack.c.b16 %v411, %v410
    %v488 = vpack.c.b16 %v413, %v412
    %v489 = vpack.c.b16 %v415, %v414
    %v490 = vpack.c.b16 %v417, %v416
    %v491 = vpack.c.b16 %v419, %v418
    %v492 = vpack.c.b16 %v421, %v420
    %v493 = vpack.c.b16 %v423, %v422
    %v494 = vpack.c.b16 %v425, %v424
    %v495 = vpack.c.b16 %v427, %v426
    %v496 = vpack.c.b16 %v429, %v428
    %v497 = vpack.c.b16 %v431, %v430
    %v498 = vpack.c.b16 %v433, %v432
    %v499 = vpack.c.b16 %v435, %v434
    %v500 = vpack.c.b16 %v437, %v436
    %v501 = vpack.c.b16 %v439, %v438
    %v502 = vpack.c.b16 %v441, %v440
    %v503 = vpack.c.b16 %v443, %v442
    %v504 = vpack.c.b16 %v445, %v444
    %v505 = vpack.c.b16 %v447, %v446
    %v506 = vpack.c.b16 %v449, %v448
    %v507 = vpack.c.b16 %v451, %v450
    %564 = vmatpush.bf16.msra.mxu0 %v459
    %565 = vmatpush.bf16.msra.mxu0 %v458
    %566 = vmatpush.bf16.msra.mxu0 %v457
    %567 = vmatpush.bf16.msra.mxu0 %v456
    %568 = vmatpush.bf16.msra.mxu0 %v455
    %569 = vmatpush.bf16.msra.mxu0 %v454
    %570 = vmatpush.bf16.msra.mxu0 %v453
    %571 = vmatpush.bf16.msra.mxu0 %v452
    %572 = vmatmul.bf16.gmra.mxu0 %v214
    %v573 = vpop.f32.mrf.mxu0
    %v574 = vadd.f32 %v190, %v573
    %v575 = vpop.f32.mrf.mxu0
    %v576 = vadd.f32 %v190, %v575
    %577 = vdwg.mxu0
    %578 = vmatpush.bf16.msra.mxu0 %v467
    %579 = vmatpush.bf16.msra.mxu0 %v466
    %580 = vmatpush.bf16.msra.mxu0 %v465
    %581 = vmatpush.bf16.msra.mxu0 %v464
    %582 = vmatpush.bf16.msra.mxu0 %v463
    %583 = vmatpush.bf16.msra.mxu0 %v462
    %584 = vmatpush.bf16.msra.mxu0 %v461
    %585 = vmatpush.bf16.msra.mxu0 %v460
    %586 = vmatmul.bf16.gmra.mxu0 %v215
    %v587 = vpop.f32.mrf.mxu0
    %v588 = vadd.f32 %v574, %v587
    %v589 = vpop.f32.mrf.mxu0
    %v590 = vadd.f32 %v576, %v589
    %591 = vdwg.mxu0
    %592 = vmatpush.bf16.msra.mxu0 %v475
    %593 = vmatpush.bf16.msra.mxu0 %v474
    %594 = vmatpush.bf16.msra.mxu0 %v473
    %595 = vmatpush.bf16.msra.mxu0 %v472
    %596 = vmatpush.bf16.msra.mxu0 %v471
    %597 = vmatpush.bf16.msra.mxu0 %v470
    %598 = vmatpush.bf16.msra.mxu0 %v469
    %599 = vmatpush.bf16.msra.mxu0 %v468
    %600 = vmatmul.bf16.gmra.mxu0 %v216
    %v601 = vpop.f32.mrf.mxu0
    %v602 = vadd.f32 %v588, %v601
    %v603 = vpop.f32.mrf.mxu0
    %v604 = vadd.f32 %v590, %v603
    %605 = vdwg.mxu0
    %606 = vmatpush.bf16.msra.mxu0 %v483
    %607 = vmatpush.bf16.msra.mxu0 %v482
    %608 = vmatpush.bf16.msra.mxu0 %v481
    %609 = vmatpush.bf16.msra.mxu0 %v480
    %610 = vmatpush.bf16.msra.mxu0 %v479
    %611 = vmatpush.bf16.msra.mxu0 %v478
    %612 = vmatpush.bf16.msra.mxu0 %v477
    %613 = vmatpush.bf16.msra.mxu0 %v476
    %614 = vmatmul.bf16.gmra.mxu0 %v217
    %v615 = vpop.f32.mrf.mxu0
    %v616 = vadd.f32 %v602, %v615
    %v617 = vpop.f32.mrf.mxu0
    %v618 = vadd.f32 %v604, %v617
    %619 = vdwg.mxu0
    %620 = vmatpush.bf16.msra.mxu0 %v491
    %621 = vmatpush.bf16.msra.mxu0 %v490
    %622 = vmatpush.bf16.msra.mxu0 %v489
    %623 = vmatpush.bf16.msra.mxu0 %v488
    %624 = vmatpush.bf16.msra.mxu0 %v487
    %625 = vmatpush.bf16.msra.mxu0 %v486
    %626 = vmatpush.bf16.msra.mxu0 %v485
    %627 = vmatpush.bf16.msra.mxu0 %v484
    %628 = vmatmul.bf16.gmra.mxu0 %v218
    %v629 = vpop.f32.mrf.mxu0
    %v630 = vadd.f32 %v616, %v629
    %v631 = vpop.f32.mrf.mxu0
    %v632 = vadd.f32 %v618, %v631
    %633 = vdwg.mxu0
    %634 = vmatpush.bf16.msra.mxu0 %v499
    %635 = vmatpush.bf16.msra.mxu0 %v498
    %636 = vmatpush.bf16.msra.mxu0 %v497
    %637 = vmatpush.bf16.msra.mxu0 %v496
    %638 = vmatpush.bf16.msra.mxu0 %v495
    %639 = vmatpush.bf16.msra.mxu0 %v494
    %640 = vmatpush.bf16.msra.mxu0 %v493
    %641 = vmatpush.bf16.msra.mxu0 %v492
    %642 = vmatmul.bf16.gmra.mxu0 %v219
    %v643 = vpop.f32.mrf.mxu0
    %v644 = vadd.f32 %v630, %v643
    %v645 = vpop.f32.mrf.mxu0
    %v646 = vadd.f32 %v632, %v645
    %647 = vdwg.mxu0
    %648 = vmatpush.bf16.msra.mxu0 %v507
    %649 = vmatpush.bf16.msra.mxu0 %v506
    %650 = vmatpush.bf16.msra.mxu0 %v505
    %651 = vmatpush.bf16.msra.mxu0 %v504
    %652 = vmatpush.bf16.msra.mxu0 %v503
    %653 = vmatpush.bf16.msra.mxu0 %v502
    %654 = vmatpush.bf16.msra.mxu0 %v501
    %655 = vmatpush.bf16.msra.mxu0 %v500
    %656 = vmatmul.bf16.gmra.mxu0 %v220
    %v657 = vpop.f32.mrf.mxu0
    %v658 = vadd.f32 %v644, %v657
    %v659 = vpop.f32.mrf.mxu0
    %v660 = vadd.f32 %v646, %v659
    %661 = vdwg.mxu0
    %v662 = vmul.f32 %v658, 0.01
    %v663 = vmul.f32 %v660, 0.01
    %v664 = vmax.f32 %v658, %v662
    %v665 = vmax.f32 %v660, %v663
    %v666 = vpack.c.bf16 %v665, %v664
    %v667 = vld [vmem:[#allocation7] sm:$0xf]
    %v668 = vld [vmem:[#allocation7 + $0x4] sm:$0xf]
    %v669 = vld [vmem:[#allocation7 + $0x8] sm:$0xf]
    %v670 = vld [vmem:[#allocation7 + $0xc] sm:$0xf]
    %v671 = vld [vmem:[#allocation7 + $0x10] sm:$0xf]
    %v672 = vld [vmem:[#allocation7 + $0x14] sm:$0xf]
    %v673 = vld [vmem:[#allocation7 + $0x18] sm:$0xf]
    %v674 = vld [vmem:[#allocation7 + $0x1c] sm:$0xf]
    %v675 = vld [vmem:[#allocation7 + $0x20] sm:$0xf]
    %v676 = vld [vmem:[#allocation7 + $0x24] sm:$0xf]
    %v677 = vld [vmem:[#allocation7 + $0x28] sm:$0xf]
    %v678 = vld [vmem:[#allocation7 + $0x2c] sm:$0xf]
    %v679 = vld [vmem:[#allocation7 + $0x30] sm:$0xf]
    %v680 = vld [vmem:[#allocation7 + $0x34] sm:$0xf]
    %v681 = vld [vmem:[#allocation7 + $0x38] sm:$0xf]
    %v682 = vld [vmem:[#allocation7 + $0x3c] sm:$0xf]
    %v683 = vld [vmem:[%s4] sm:$0x1]
    %v685 = vperm.slane %v683, 0
    %v703 = vunpack.c.l.b16 %v667
    %v704 = vunpack.c.l.b16 %v668
    %v705 = vunpack.c.l.b16 %v669
    %v706 = vunpack.c.l.b16 %v670
    %v707 = vunpack.c.l.b16 %v671
    %v708 = vunpack.c.l.b16 %v672
    %v709 = vunpack.c.l.b16 %v673
    %v710 = vunpack.c.l.b16 %v674
    %v711 = vunpack.c.l.b16 %v675
    %v712 = vunpack.c.l.b16 %v676
    %v713 = vunpack.c.l.b16 %v677
    %v714 = vunpack.c.l.b16 %v678
    %v715 = vunpack.c.l.b16 %v679
    %v716 = vunpack.c.l.b16 %v680
    %v717 = vunpack.c.l.b16 %v681
    %v718 = vunpack.c.l.b16 %v682
    %v719 = vpack.c.b16 %v704, %v703
    %v720 = vpack.c.b16 %v706, %v705
    %v721 = vpack.c.b16 %v708, %v707
    %v722 = vpack.c.b16 %v710, %v709
    %v723 = vpack.c.b16 %v712, %v711
    %v724 = vpack.c.b16 %v714, %v713
    %v725 = vpack.c.b16 %v716, %v715
    %v726 = vpack.c.b16 %v718, %v717
    %735 = vmatpush.bf16.msra.mxu0 %v726
    %736 = vmatpush.bf16.msra.mxu0 %v725
    %737 = vmatpush.bf16.msra.mxu0 %v724
    %738 = vmatpush.bf16.msra.mxu0 %v723
    %739 = vmatpush.bf16.msra.mxu0 %v722
    %740 = vmatpush.bf16.msra.mxu0 %v721
    %741 = vmatpush.bf16.msra.mxu0 %v720
    %742 = vmatpush.bf16.msra.mxu0 %v719
    %743 = vmatmul.bf16.gmra.mxu0 %v666
    %v744 = vpop.f32.mrf.mxu0
    %v745 = vadd.f32 %v685, %v744
    %v746 = vpop.f32.mrf.mxu0
    %v747 = vadd.f32 %v685, %v746
    %748 = vdwg.mxu0
    %v749 = vmul.f32 %v745, 0.01
    %v750 = vmul.f32 %v747, 0.01
    %v751 = vmax.f32 %v745, %v749
    %v752 = vmax.f32 %v747, %v750
    %753 = vst [vmem:[#allocation8] sm:$0xff] %v751
    %754 = vst [vmem:[#allocation8 + $0x8] sm:$0xff] %v752
    // Predicated region
    $region34: #{tpu_custom_call.1} parent=1 // pred_check
      _
    $region35: #{tpu_custom_call.1} parent=1 // pred_check_branch
      %756 = sbr.rel (0) target = $region37
    $region36: #{tpu_custom_call.1} parent=1 // pred_region
      %758 = vsyncadd [#allocation4], 0
      %s759 = sshll.u32 [#allocation8], 4
      %s760 = int_to_ptr.vmem [resolvable:$true] %s759
      %s761 = sshll.u32 %s5, 4
      %s762 = int_to_ptr.hbm [resolvable:$true] %s761
      %767 = dma.vmem_to_hbm [thread:$0]  %s760, 256, %s762, [#allocation4], 128, 128, 8
    $region37: #{tpu_custom_call.1} parent=1 // pred_fallthru
      _
    // Predicated region
    $region38: #{tpu_custom_call.1} parent=1 // pred_check
      _
    $region39: #{tpu_custom_call.1} parent=1 // pred_check_branch
      %769 = sbr.rel (0) target = $region41
    $region40: #{tpu_custom_call.1} parent=1 // pred_region
      %771 = dma.done [#allocation4], 256
    $region41: #{tpu_custom_call.1} parent=1 // pred_fallthru
      _
    %772 = vsyncpa [#allocation3], 1
    %773 = vsyncpa [#allocation6], 1
    %774 = vsyncpa [#allocation4], 1

</llo_original>
